<compile_context>
chip_gen: v7x
topology: tpu7x:2x2x1
jax: 0.10.0
libtpu: 0.0.40
codegen_flags: <defaults>
</compile_context>

<pallas_src>
import numpy as np
import jax
import jax.numpy as jnp
from jax import lax
from jax.experimental import pallas as pl
from jax.experimental.pallas import tpu as pltpu


def _make_kernel(bn, Cin_pad, Cout, H, W):
    Wp = W + 2                      # padded row stride
    HWp = H * Wp                    # per-image flattened "padded-width" output grid
    PAD = (H + 2) * Wp + 2          # wrapper-padded input length (keeps dh=2,dw=2 tap in bounds)
    L = bn * HWp                    # lane extent of the batched activation slab
    Lr = L - 1 - Wp                 # length of the 2x2 window-max array

    def kernel(x_ref, w1_ref, b1_ref, w2_ref, b2_ref, mask_ref, sel_ref,
               pool_ref, bp_ref, y1pad_ref):
        w1 = w1_ref[...]            # (Cout, 9*Cin_pad)
        w2 = w2_ref[...]            # (Cout, 9*Cout)
        b1 = b1_ref[...]            # (Cout, 1)
        b2 = b2_ref[...]            # (Cout, 1)
        mask = mask_ref[...]        # (1, L): 1.0 on real columns, 0.0 on wrap columns
        sel = sel_ref[...]          # (Lr, P_pad): 0/1 gather matrix for the pool

        def im2col(get_slab):
            # 9 tap windows, each a contiguous lane slice (row stride Wp); images
            # concatenated along lanes, taps along sublanes (tile-aligned: Cin_pad=8).
            taps = []
            for dh in range(3):
                for dw in range(3):
                    off = dh * Wp + dw
                    slabs = [get_slab(i, off) for i in range(bn)]
                    taps.append(slabs[0] if bn == 1 else jnp.concatenate(slabs, axis=1))
            return jnp.concatenate(taps, axis=0)

        # ---- conv1: taps sliced directly from the wrapper-padded input, one MXU matmul
        cols1 = im2col(lambda i, off: x_ref[i, :, off:off + HWp])      # (9*Cin_pad, L)
        y1 = jnp.maximum(jnp.dot(w1, cols1, preferred_element_type=jnp.float32) + b1, 0.0)
        # zero the 2 wrap columns per row: they land exactly on conv2's padding positions
        y1 = y1 * mask

        # ---- re-pad y1 per image for conv2 (dense zero-fill + one dense interior store)
        for i in range(bn):
            y1pad_ref[i] = jnp.zeros((Cout, PAD), jnp.float32)
            y1pad_ref[i, :, Wp + 1:Wp + 1 + HWp] = y1[:, i * HWp:(i + 1) * HWp]

        # ---- conv2
        cols2 = im2col(lambda i, off: y1pad_ref[i, :, off:off + HWp])  # (9*Cout, L)
        y2 = jnp.maximum(jnp.dot(w2, cols2, preferred_element_type=jnp.float32) + b2, 0.0)

        # ---- before_pool: one dense 288-lane store per image (padded-width layout);
        #      the wrap columns are dropped by a free XLA slice in the wrapper.
        for i in range(bn):
            bp_ref[i] = y2[:, i * HWp:(i + 1) * HWp]

        # ---- 2x2 / stride-2 max pool: shifted-slice maxima on the VPU, then one 0/1
        #      gather matmul on the otherwise-idle MXU -> lane-dense 128-wide store.
        #      (sel anchors never touch wrap columns / image seams -- see wrapper.)
        cm = jnp.maximum(y2[:, :L - 1], y2[:, 1:])      # pair (w, w+1)
        rm = jnp.maximum(cm[:, :Lr], cm[:, Wp:])        # pair (h, h+1)
        pool_ref[0] = jnp.dot(rm, sel, preferred_element_type=jnp.float32)

    return kernel


def down_conv(x_nchw, w1, b1, w2, b2, *, bn=None):
    """DownConv.forward (pooling=True).
    x_nchw: (N, Cin, H, W); w*: torch layout (Cout, Cin|Cout, 3, 3); b*: (Cout,).
    Returns (pooled, before_pool) in NCHW."""
    N, Cin, H, W = x_nchw.shape
    Cout = w1.shape[0]
    assert H % 2 == 0 and W % 2 == 0, "MaxPool2d(2,2) path assumes even H and W"
    assert Cout % 8 == 0, "TODO(synk): pad Cout to a sublane-tile multiple for other sizes"
    Hh, Wh = H // 2, W // 2
    Wp = W + 2
    HWp = H * Wp
    PAD = (H + 2) * Wp + 2
    Cin_pad = ((Cin + 7) // 8) * 8      # full sublane tile per tap block

    if bn is None:
        # keep >= 2 grid steps so both v7x TensorCores get work; raise bn for large N
        # (on v5e/v6e "parallel" is a no-op, larger bn just amortizes per-step overhead)
        bn = 1 if N <= 2 else 2
    assert N % bn == 0
    L = bn * HWp
    Lr = L - 1 - Wp
    P = bn * Hh * Wh
    P_pad = max(128, -(-P // 128) * 128)    # lane-dense pooled store

    # ---- wrapper-side zero padding (cheap XLA pad of a few-KB tensor): channel pad to
    # a full sublane tile, 1-pixel spatial halo, +2 trailing lanes for the (2,2) tap.
    xp = jnp.pad(x_nchw.astype(jnp.float32),
                 ((0, 0), (0, Cin_pad - Cin), (1, 1), (1, 1)))
    xp = xp.reshape(N, Cin_pad, (H + 2) * Wp)
    xp = jnp.pad(xp, ((0, 0), (0, 0), (0, 2)))           # (N, Cin_pad, PAD)

    # ---- weights in im2col layout (tap-major, channel-minor); padded Cin columns are 0.
    w1p = jnp.pad(w1.astype(jnp.float32), ((0, 0), (0, Cin_pad - Cin), (0, 0), (0, 0)))
    w1k = jnp.transpose(w1p, (0, 2, 3, 1)).reshape(Cout, 9 * Cin_pad)
    w2k = jnp.transpose(w2.astype(jnp.float32), (0, 2, 3, 1)).reshape(Cout, 9 * Cout)
    b1k = b1.reshape(Cout, 1).astype(jnp.float32)
    b2k = b2.reshape(Cout, 1).astype(jnp.float32)

    # ---- constants built with numpy (static shapes only).
    # 1.0 on real columns (w < W), 0.0 on the two wrap columns of each padded row.
    mask = jnp.asarray((np.arange(L) % Wp < W).astype(np.float32).reshape(1, L))
    # 0/1 gather matrix: pooled column p <- window max at its 2x2 anchor position.
    pidx = np.arange(P)
    img, q = pidx // (Hh * Wh), pidx % (Hh * Wh)
    anchors = img * HWp + 2 * (q // Wh) * Wp + 2 * (q % Wh)
    # Each anchor's 2x2 window {+0,+1,+Wp,+Wp+1} stays at cols <= W-1 and rows <= H-1 of
    # its own image, so wrap-column garbage / seam values are never selected.
    assert anchors.max() < Lr
    assert (anchors % Wp).max() <= W - 2 and ((anchors % HWp) // Wp).max() <= H - 2
    sel_np = np.zeros((Lr, P_pad), np.float32)
    sel_np[anchors, pidx] = 1.0
    sel = jnp.asarray(sel_np)

    kernel = _make_kernel(bn, Cin_pad, Cout, H, W)

    pooled, before_pool = pl.pallas_call(
        kernel,
        out_shape=(
            jax.ShapeDtypeStruct((N // bn, Cout, P_pad), jnp.float32),
            jax.ShapeDtypeStruct((N, Cout, HWp), jnp.float32),
        ),
        grid_spec=pltpu.PrefetchScalarGridSpec(
            num_scalar_prefetch=0,
            grid=(N // bn,),
            in_specs=[
                pl.BlockSpec((bn, Cin_pad, PAD), lambda n: (n, 0, 0)),
                pl.BlockSpec((Cout, 9 * Cin_pad), lambda n: (0, 0)),
                pl.BlockSpec((Cout, 1), lambda n: (0, 0)),
                pl.BlockSpec((Cout, 9 * Cout), lambda n: (0, 0)),
                pl.BlockSpec((Cout, 1), lambda n: (0, 0)),
                pl.BlockSpec((1, L), lambda n: (0, 0)),
                pl.BlockSpec((Lr, P_pad), lambda n: (0, 0)),
            ],
            out_specs=[
                pl.BlockSpec((1, Cout, P_pad), lambda n: (n, 0, 0)),
                pl.BlockSpec((bn, Cout, HWp), lambda n: (n, 0, 0)),
            ],
            scratch_shapes=[
                pltpu.VMEM((bn, Cout, PAD), jnp.float32),   # padded conv1 output
            ],
        ),
        compiler_params=pltpu.CompilerParams(dimension_semantics=("parallel",)),
    )(xp, w1k, b1k, w2k, b2k, mask, sel)

    # unpack: pooled images are concatenated along lanes per grid step.
    pooled = pooled[:, :, :P].reshape(N // bn, Cout, bn, Hh, Wh)
    pooled = jnp.transpose(pooled, (0, 2, 1, 3, 4)).reshape(N, Cout, Hh, Wh)
    # before_pool: drop the 2 wrap columns per row with a free XLA slice.
    before_pool = before_pool.reshape(N, Cout, H, Wp)[:, :, :, :W]
    return pooled, before_pool


def _ref_down_conv(x, w1, b1, w2, b2):
    dn = lax.conv_dimension_numbers(x.shape, w1.shape, ('NCHW', 'OIHW', 'NCHW'))
    y = lax.conv_general_dilated(x, w1, (1, 1), ((1, 1), (1, 1)), dimension_numbers=dn)
    y = jnp.maximum(y + b1[None, :, None, None], 0.0)
    y = lax.conv_general_dilated(y, w2, (1, 1), ((1, 1), (1, 1)), dimension_numbers=dn)
    y = jnp.maximum(y + b2[None, :, None, None], 0.0)
    bp = y
    p = lax.reduce_window(y, -jnp.inf, lax.max, (1, 1, 2, 2), (1, 1, 2, 2), 'VALID')
    return p, bp


if __name__ == "__main__":
    key = jax.random.PRNGKey(0)
    kx, k1, kb1, k2, kb2 = jax.random.split(key, 5)
    N, Cin, H, W = 2, 4, 16, 16
    Cout = 8  # DownConv(in_channels=4, out_channels=8, pooling=True)

    x = jax.random.normal(kx, (N, Cin, H, W), jnp.float32)
    w1 = jax.random.normal(k1, (Cout, Cin, 3, 3), jnp.float32) * 0.1
    b1 = jax.random.normal(kb1, (Cout,), jnp.float32) * 0.1
    w2 = jax.random.normal(k2, (Cout, Cout, 3, 3), jnp.float32) * 0.1
    b2 = jax.random.normal(kb2, (Cout,), jnp.float32) * 0.1

    pooled, before_pool = jax.block_until_ready(down_conv(x, w1, b1, w2, b2))

    ref_p, ref_bp = _ref_down_conv(x, w1, b1, w2, b2)
    assert pooled.shape == (N, Cout, H // 2, W // 2)
    assert before_pool.shape == (N, Cout, H, W)
    assert jnp.allclose(pooled, ref_p, atol=1e-4, rtol=1e-4)
    assert jnp.allclose(before_pool, ref_bp, atol=1e-4, rtol=1e-4)
    print("KERNEL_OK")
</pallas_src>

<mosaic_0001>
module attributes {stable_mosaic.version = 11 : i64} {
  func.func @kernel(%arg0: i32, %arg1: memref<1x8x326xf32, #tpu.memory_space<vmem>>, %arg2: memref<8x72xf32, #tpu.memory_space<vmem>>, %arg3: memref<8x1xf32, #tpu.memory_space<vmem>>, %arg4: memref<8x72xf32, #tpu.memory_space<vmem>>, %arg5: memref<8x1xf32, #tpu.memory_space<vmem>>, %arg6: memref<1x288xf32, #tpu.memory_space<vmem>>, %arg7: memref<269x128xf32, #tpu.memory_space<vmem>>, %arg8: memref<1x8x128xf32, #tpu.memory_space<vmem>>, %arg9: memref<1x8x288xf32, #tpu.memory_space<vmem>>, %arg10: memref<1x8x326xf32, #tpu.memory_space<vmem>>) attributes {dimension_semantics = [#tpu.dimension_semantics<parallel>], iteration_bounds = array<i64: 2>, scalar_prefetch = 0 : i64, scratch_operands = 1 : i64, tpu.core_type = #tpu.core_type<tc>, window_params = [{transform_indices = @transform_0, window_bounds = array<i64: 1, 8, 326>}, {pipeline_mode = #tpu.pipeline_mode<synchronous>, transform_indices = @transform_1, window_bounds = array<i64: 8, 72>}, {pipeline_mode = #tpu.pipeline_mode<synchronous>, transform_indices = @transform_2, window_bounds = array<i64: 8, 1>}, {pipeline_mode = #tpu.pipeline_mode<synchronous>, transform_indices = @transform_3, window_bounds = array<i64: 8, 72>}, {pipeline_mode = #tpu.pipeline_mode<synchronous>, transform_indices = @transform_4, window_bounds = array<i64: 8, 1>}, {pipeline_mode = #tpu.pipeline_mode<synchronous>, transform_indices = @transform_5, window_bounds = array<i64: 1, 288>}, {pipeline_mode = #tpu.pipeline_mode<synchronous>, transform_indices = @transform_6, window_bounds = array<i64: 269, 128>}, {transform_indices = @transform_7, window_bounds = array<i64: 1, 8, 128>}, {transform_indices = @transform_8, window_bounds = array<i64: 1, 8, 288>}]} {
    %c0 = arith.constant 0 : index
    %c0_0 = arith.constant 0 : index
    %0 = vector.load %arg2[%c0, %c0_0] : memref<8x72xf32, #tpu.memory_space<vmem>>, vector<8x72xf32>
    %c0_1 = arith.constant 0 : index
    %c0_2 = arith.constant 0 : index
    %1 = vector.load %arg4[%c0_1, %c0_2] : memref<8x72xf32, #tpu.memory_space<vmem>>, vector<8x72xf32>
    %c0_3 = arith.constant 0 : index
    %c0_4 = arith.constant 0 : index
    %2 = vector.load %arg3[%c0_3, %c0_4] : memref<8x1xf32, #tpu.memory_space<vmem>>, vector<8x1xf32>
    %c0_5 = arith.constant 0 : index
    %c0_6 = arith.constant 0 : index
    %3 = vector.load %arg5[%c0_5, %c0_6] : memref<8x1xf32, #tpu.memory_space<vmem>>, vector<8x1xf32>
    %c0_7 = arith.constant 0 : index
    %c0_8 = arith.constant 0 : index
    %4 = vector.load %arg6[%c0_7, %c0_8] : memref<1x288xf32, #tpu.memory_space<vmem>>, vector<1x288xf32>
    %c0_9 = arith.constant 0 : index
    %c0_10 = arith.constant 0 : index
    %5 = vector.load %arg7[%c0_9, %c0_10] : memref<269x128xf32, #tpu.memory_space<vmem>>, vector<269x128xf32>
    %c0_11 = arith.constant 0 : index
    %c0_12 = arith.constant 0 : index
    %c0_13 = arith.constant 0 : index
    %6 = vector.load %arg1[%c0_11, %c0_12, %c0_13] : memref<1x8x326xf32, #tpu.memory_space<vmem>>, vector<1x8x288xf32>
    %7 = vector.shape_cast %6 : vector<1x8x288xf32> to vector<8x288xf32>
    %c0_14 = arith.constant 0 : index
    %c0_15 = arith.constant 0 : index
    %c1 = arith.constant 1 : index
    %8 = vector.load %arg1[%c0_14, %c0_15, %c1] : memref<1x8x326xf32, #tpu.memory_space<vmem>>, vector<1x8x288xf32>
    %9 = vector.shape_cast %8 : vector<1x8x288xf32> to vector<8x288xf32>
    %c0_16 = arith.constant 0 : index
    %c0_17 = arith.constant 0 : index
    %c2 = arith.constant 2 : index
    %10 = vector.load %arg1[%c0_16, %c0_17, %c2] : memref<1x8x326xf32, #tpu.memory_space<vmem>>, vector<1x8x288xf32>
    %11 = vector.shape_cast %10 : vector<1x8x288xf32> to vector<8x288xf32>
    %c0_18 = arith.constant 0 : index
    %c0_19 = arith.constant 0 : index
    %c18 = arith.constant 18 : index
    %12 = vector.load %arg1[%c0_18, %c0_19, %c18] : memref<1x8x326xf32, #tpu.memory_space<vmem>>, vector<1x8x288xf32>
    %13 = vector.shape_cast %12 : vector<1x8x288xf32> to vector<8x288xf32>
    %c0_20 = arith.constant 0 : index
    %c0_21 = arith.constant 0 : index
    %c19 = arith.constant 19 : index
    %14 = vector.load %arg1[%c0_20, %c0_21, %c19] : memref<1x8x326xf32, #tpu.memory_space<vmem>>, vector<1x8x288xf32>
    %15 = vector.shape_cast %14 : vector<1x8x288xf32> to vector<8x288xf32>
    %c0_22 = arith.constant 0 : index
    %c0_23 = arith.constant 0 : index
    %c20 = arith.constant 20 : index
    %16 = vector.load %arg1[%c0_22, %c0_23, %c20] : memref<1x8x326xf32, #tpu.memory_space<vmem>>, vector<1x8x288xf32>
    %17 = vector.shape_cast %16 : vector<1x8x288xf32> to vector<8x288xf32>
    %c0_24 = arith.constant 0 : index
    %c0_25 = arith.constant 0 : index
    %c36 = arith.constant 36 : index
    %18 = vector.load %arg1[%c0_24, %c0_25, %c36] : memref<1x8x326xf32, #tpu.memory_space<vmem>>, vector<1x8x288xf32>
    %19 = vector.shape_cast %18 : vector<1x8x288xf32> to vector<8x288xf32>
    %c0_26 = arith.constant 0 : index
    %c0_27 = arith.constant 0 : index
    %c37 = arith.constant 37 : index
    %20 = vector.load %arg1[%c0_26, %c0_27, %c37] : memref<1x8x326xf32, #tpu.memory_space<vmem>>, vector<1x8x288xf32>
    %21 = vector.shape_cast %20 : vector<1x8x288xf32> to vector<8x288xf32>
    %c0_28 = arith.constant 0 : index
    %c0_29 = arith.constant 0 : index
    %c38 = arith.constant 38 : index
    %22 = vector.load %arg1[%c0_28, %c0_29, %c38] : memref<1x8x326xf32, #tpu.memory_space<vmem>>, vector<1x8x288xf32>
    %23 = vector.shape_cast %22 : vector<1x8x288xf32> to vector<8x288xf32>
    %24 = tpu.concatenate %7, %9, %11, %13, %15, %17, %19, %21, %23 in 0 : vector<8x288xf32>, vector<8x288xf32>, vector<8x288xf32>, vector<8x288xf32>, vector<8x288xf32>, vector<8x288xf32>, vector<8x288xf32>, vector<8x288xf32>, vector<8x288xf32> -> vector<72x288xf32>
    %cst = arith.constant dense<0.000000e+00> : vector<8x288xf32>
    %25 = tpu.matmul %0, %24, %cst {dimension_numbers = #tpu.dot_dimension_numbers<[1], [0], [0], [1], [0, 0, 1, 1], [], []>} : vector<8x72xf32>, vector<72x288xf32>, vector<8x288xf32> -> vector<8x288xf32>
    %26 = vector.broadcast %2 : vector<8x1xf32> to vector<8x288xf32>
    %27 = arith.addf %25, %26 : vector<8x288xf32>
    %cst_30 = arith.constant 0.000000e+00 : f32
    %28 = vector.broadcast %cst_30 : f32 to vector<8x288xf32>
    %29 = arith.maximumf %27, %28 : vector<8x288xf32>
    %30 = vector.broadcast %4 : vector<1x288xf32> to vector<8x288xf32>
    %31 = arith.mulf %29, %30 : vector<8x288xf32>
    %cst_31 = arith.constant 0.000000e+00 : f32
    %32 = vector.broadcast %cst_31 : f32 to vector<8x326xf32>
    %c0_32 = arith.constant 0 : index
    %c0_33 = arith.constant 0 : index
    %c0_34 = arith.constant 0 : index
    %33 = vector.load %arg10[%c0_32, %c0_33, %c0_34] : memref<1x8x326xf32, #tpu.memory_space<vmem>>, vector<1x8x326xf32>
    %34 = vector.shape_cast %33 : vector<1x8x326xf32> to vector<8x326xf32>
    %35 = vector.shape_cast %32 : vector<8x326xf32> to vector<1x8x326xf32>
    tpu.vector_store %arg10[%c0_32, %c0_33, %c0_34], %35 {strides = array<i32>} : memref<1x8x326xf32, #tpu.memory_space<vmem>>, vector<1x8x326xf32>,
    %c0_35 = arith.constant 0 : index
    %c0_36 = arith.constant 0 : index
    %c19_37 = arith.constant 19 : index
    %36 = vector.load %arg10[%c0_35, %c0_36, %c19_37] : memref<1x8x326xf32, #tpu.memory_space<vmem>>, vector<1x8x288xf32>
    %37 = vector.shape_cast %36 : vector<1x8x288xf32> to vector<8x288xf32>
    %38 = vector.shape_cast %31 : vector<8x288xf32> to vector<1x8x288xf32>
    tpu.vector_store %arg10[%c0_35, %c0_36, %c19_37], %38 {strides = array<i32>} : memref<1x8x326xf32, #tpu.memory_space<vmem>>, vector<1x8x288xf32>,
    %c0_38 = arith.constant 0 : index
    %c0_39 = arith.constant 0 : index
    %c0_40 = arith.constant 0 : index
    %39 = vector.load %arg10[%c0_38, %c0_39, %c0_40] : memref<1x8x326xf32, #tpu.memory_space<vmem>>, vector<1x8x288xf32>
    %40 = vector.shape_cast %39 : vector<1x8x288xf32> to vector<8x288xf32>
    %c0_41 = arith.constant 0 : index
    %c0_42 = arith.constant 0 : index
    %c1_43 = arith.constant 1 : index
    %41 = vector.load %arg10[%c0_41, %c0_42, %c1_43] : memref<1x8x326xf32, #tpu.memory_space<vmem>>, vector<1x8x288xf32>
    %42 = vector.shape_cast %41 : vector<1x8x288xf32> to vector<8x288xf32>
    %c0_44 = arith.constant 0 : index
    %c0_45 = arith.constant 0 : index
    %c2_46 = arith.constant 2 : index
    %43 = vector.load %arg10[%c0_44, %c0_45, %c2_46] : memref<1x8x326xf32, #tpu.memory_space<vmem>>, vector<1x8x288xf32>
    %44 = vector.shape_cast %43 : vector<1x8x288xf32> to vector<8x288xf32>
    %c0_47 = arith.constant 0 : index
    %c0_48 = arith.constant 0 : index
    %c18_49 = arith.constant 18 : index
    %45 = vector.load %arg10[%c0_47, %c0_48, %c18_49] : memref<1x8x326xf32, #tpu.memory_space<vmem>>, vector<1x8x288xf32>
    %46 = vector.shape_cast %45 : vector<1x8x288xf32> to vector<8x288xf32>
    %c0_50 = arith.constant 0 : index
    %c0_51 = arith.constant 0 : index
    %c19_52 = arith.constant 19 : index
    %47 = vector.load %arg10[%c0_50, %c0_51, %c19_52] : memref<1x8x326xf32, #tpu.memory_space<vmem>>, vector<1x8x288xf32>
    %48 = vector.shape_cast %47 : vector<1x8x288xf32> to vector<8x288xf32>
    %c0_53 = arith.constant 0 : index
    %c0_54 = arith.constant 0 : index
    %c20_55 = arith.constant 20 : index
    %49 = vector.load %arg10[%c0_53, %c0_54, %c20_55] : memref<1x8x326xf32, #tpu.memory_space<vmem>>, vector<1x8x288xf32>
    %50 = vector.shape_cast %49 : vector<1x8x288xf32> to vector<8x288xf32>
    %c0_56 = arith.constant 0 : index
    %c0_57 = arith.constant 0 : index
    %c36_58 = arith.constant 36 : index
    %51 = vector.load %arg10[%c0_56, %c0_57, %c36_58] : memref<1x8x326xf32, #tpu.memory_space<vmem>>, vector<1x8x288xf32>
    %52 = vector.shape_cast %51 : vector<1x8x288xf32> to vector<8x288xf32>
    %c0_59 = arith.constant 0 : index
    %c0_60 = arith.constant 0 : index
    %c37_61 = arith.constant 37 : index
    %53 = vector.load %arg10[%c0_59, %c0_60, %c37_61] : memref<1x8x326xf32, #tpu.memory_space<vmem>>, vector<1x8x288xf32>
    %54 = vector.shape_cast %53 : vector<1x8x288xf32> to vector<8x288xf32>
    %c0_62 = arith.constant 0 : index
    %c0_63 = arith.constant 0 : index
    %c38_64 = arith.constant 38 : index
    %55 = vector.load %arg10[%c0_62, %c0_63, %c38_64] : memref<1x8x326xf32, #tpu.memory_space<vmem>>, vector<1x8x288xf32>
    %56 = vector.shape_cast %55 : vector<1x8x288xf32> to vector<8x288xf32>
    %57 = tpu.concatenate %40, %42, %44, %46, %48, %50, %52, %54, %56 in 0 : vector<8x288xf32>, vector<8x288xf32>, vector<8x288xf32>, vector<8x288xf32>, vector<8x288xf32>, vector<8x288xf32>, vector<8x288xf32>, vector<8x288xf32>, vector<8x288xf32> -> vector<72x288xf32>
    %cst_65 = arith.constant dense<0.000000e+00> : vector<8x288xf32>
    %58 = tpu.matmul %1, %57, %cst_65 {dimension_numbers = #tpu.dot_dimension_numbers<[1], [0], [0], [1], [0, 0, 1, 1], [], []>} : vector<8x72xf32>, vector<72x288xf32>, vector<8x288xf32> -> vector<8x288xf32>
    %59 = vector.broadcast %3 : vector<8x1xf32> to vector<8x288xf32>
    %60 = arith.addf %58, %59 : vector<8x288xf32>
    %cst_66 = arith.constant 0.000000e+00 : f32
    %61 = vector.broadcast %cst_66 : f32 to vector<8x288xf32>
    %62 = arith.maximumf %60, %61 : vector<8x288xf32>
    %c0_67 = arith.constant 0 : index
    %c0_68 = arith.constant 0 : index
    %c0_69 = arith.constant 0 : index
    %63 = vector.load %arg9[%c0_67, %c0_68, %c0_69] : memref<1x8x288xf32, #tpu.memory_space<vmem>>, vector<1x8x288xf32>
    %64 = vector.shape_cast %63 : vector<1x8x288xf32> to vector<8x288xf32>
    %65 = vector.shape_cast %62 : vector<8x288xf32> to vector<1x8x288xf32>
    tpu.vector_store %arg9[%c0_67, %c0_68, %c0_69], %65 {strides = array<i32>} : memref<1x8x288xf32, #tpu.memory_space<vmem>>, vector<1x8x288xf32>,
    %66 = vector.extract_strided_slice %62 {offsets = [0, 0], sizes = [8, 287], strides = [1, 1]} : vector<8x288xf32> to vector<8x287xf32>
    %67 = vector.extract_strided_slice %62 {offsets = [0, 1], sizes = [8, 287], strides = [1, 1]} : vector<8x288xf32> to vector<8x287xf32>
    %68 = arith.maximumf %66, %67 : vector<8x287xf32>
    %69 = vector.extract_strided_slice %68 {offsets = [0, 0], sizes = [8, 269], strides = [1, 1]} : vector<8x287xf32> to vector<8x269xf32>
    %70 = vector.extract_strided_slice %68 {offsets = [0, 18], sizes = [8, 269], strides = [1, 1]} : vector<8x287xf32> to vector<8x269xf32>
    %71 = arith.maximumf %69, %70 : vector<8x269xf32>
    %cst_70 = arith.constant dense<0.000000e+00> : vector<8x128xf32>
    %72 = tpu.matmul %71, %5, %cst_70 {dimension_numbers = #tpu.dot_dimension_numbers<[1], [0], [0], [1], [0, 0, 1, 1], [], []>} : vector<8x269xf32>, vector<269x128xf32>, vector<8x128xf32> -> vector<8x128xf32>
    %c0_71 = arith.constant 0 : index
    %c0_72 = arith.constant 0 : index
    %c0_73 = arith.constant 0 : index
    %73 = vector.load %arg8[%c0_71, %c0_72, %c0_73] : memref<1x8x128xf32, #tpu.memory_space<vmem>>, vector<1x8x128xf32>
    %74 = vector.shape_cast %73 : vector<1x8x128xf32> to vector<8x128xf32>
    %75 = vector.shape_cast %72 : vector<8x128xf32> to vector<1x8x128xf32>
    tpu.vector_store %arg8[%c0_71, %c0_72, %c0_73], %75 {strides = array<i32>} : memref<1x8x128xf32, #tpu.memory_space<vmem>>, vector<1x8x128xf32>,
    return
  }
  func.func @transform_0(%arg0: i32) -> (i32, i32, i32) {
    %c0_i32 = arith.constant 0 : i32
    %c0_i32_0 = arith.constant 0 : i32
    %c0_i32_1 = arith.constant 0 : i32
    return %arg0, %c0_i32, %c0_i32_0 : i32, i32, i32
  }
  func.func @transform_1(%arg0: i32) -> (i32, i32) {
    %c0_i32 = arith.constant 0 : i32
    %c0_i32_0 = arith.constant 0 : i32
    %c0_i32_1 = arith.constant 0 : i32
    return %c0_i32, %c0_i32_0 : i32, i32
  }
  func.func @transform_2(%arg0: i32) -> (i32, i32) {
    %c0_i32 = arith.constant 0 : i32
    %c0_i32_0 = arith.constant 0 : i32
    %c0_i32_1 = arith.constant 0 : i32
    return %c0_i32, %c0_i32_0 : i32, i32
  }
  func.func @transform_3(%arg0: i32) -> (i32, i32) {
    %c0_i32 = arith.constant 0 : i32
    %c0_i32_0 = arith.constant 0 : i32
    %c0_i32_1 = arith.constant 0 : i32
    return %c0_i32, %c0_i32_0 : i32, i32
  }
  func.func @transform_4(%arg0: i32) -> (i32, i32) {
    %c0_i32 = arith.constant 0 : i32
    %c0_i32_0 = arith.constant 0 : i32
    %c0_i32_1 = arith.constant 0 : i32
    return %c0_i32, %c0_i32_0 : i32, i32
  }
  func.func @transform_5(%arg0: i32) -> (i32, i32) {
    %c0_i32 = arith.constant 0 : i32
    %c0_i32_0 = arith.constant 0 : i32
    %c0_i32_1 = arith.constant 0 : i32
    return %c0_i32, %c0_i32_0 : i32, i32
  }
  func.func @transform_6(%arg0: i32) -> (i32, i32) {
    %c0_i32 = arith.constant 0 : i32
    %c0_i32_0 = arith.constant 0 : i32
    %c0_i32_1 = arith.constant 0 : i32
    return %c0_i32, %c0_i32_0 : i32, i32
  }
  func.func @transform_7(%arg0: i32) -> (i32, i32, i32) {
    %c0_i32 = arith.constant 0 : i32
    %c0_i32_0 = arith.constant 0 : i32
    %c0_i32_1 = arith.constant 0 : i32
    return %arg0, %c0_i32, %c0_i32_0 : i32, i32, i32
  }
  func.func @transform_8(%arg0: i32) -> (i32, i32, i32) {
    %c0_i32 = arith.constant 0 : i32
    %c0_i32_0 = arith.constant 0 : i32
    %c0_i32_1 = arith.constant 0 : i32
    return %arg0, %c0_i32, %c0_i32_0 : i32, i32, i32
  }
}

</mosaic_0001>

<llo_original>
// kernel: tpu_custom_call.1
$region0: #{tpu_custom_call.1}
  #allocation0 [shape = 'u32[]', space=smem, size = 0x4, offset = 0x4, fixed_abs, tag = 'smem constant byte address 0x4 - core index']
  #allocation1 [shape = 'u32[144,128]{1,0:T(1,128)}', space=vmem, size = 0x12000, scoped, tag = 'internal scratch']
  #allocation2 [shape = 'f32[1,8,326]{2,1,0:T(8,128)}', space=vmem, size = 0x3000, scoped, tag = 'scratch operand']
  %s0 = inlined_call_operand.hbm [shape: f32[2,8,326], index: 0, kind: input, shape index: {}]
  %s1 = inlined_call_operand.vmem [shape: f32[8,72], index: 1, kind: input, shape index: {}]
  %s2 = inlined_call_operand.vmem [shape: f32[8,1], index: 2, kind: input, shape index: {}]
  %s3 = inlined_call_operand.vmem [shape: f32[8,72], index: 3, kind: input, shape index: {}]
  %s4 = inlined_call_operand.vmem [shape: f32[8,1], index: 4, kind: input, shape index: {}]
  %s5 = inlined_call_operand.vmem [shape: f32[1,288], index: 5, kind: input, shape index: {}]
  %s6 = inlined_call_operand.hbm [shape: f32[269,128], index: 6, kind: input, shape index: {}]
  %s7 = inlined_call_operand.hbm [shape: f32[2,8,128], index: 7, kind: output, shape index: {0}]
  %s8 = inlined_call_operand.hbm [shape: f32[2,8,288], index: 8, kind: output, shape index: {1}]
  %9 = xla_tuple %s7, %s8
  %s10 = sld [smem:[#allocation0]]
  $region77: #{tpu_custom_call.1} parent=0
    _
  %s12 = ssub.s32 1, %s10
  %s13 = scalar_select 0, %s12, %s10
  $region1: #{tpu_custom_call.1} parent=0
    #allocation3 [shape = 'u8[24576]{0}', space=vmem, size = 0x6000, scoped, tag = 'input window, operand 0']
    #allocation4 [shape = 's32[2]{0}', space=sflag, size = 0x8, scoped, tag = 'scoped memory for tpu_custom_call.1']
    #allocation5 [shape = 's32[2]{0}', space=sflag, size = 0x8, scoped, tag = 'scoped memory for tpu_custom_call.1']
    #allocation6 [shape = 'u8[139264]{0}', space=vmem, size = 0x22000, scoped, tag = 'input window, operand 6, single buffered']
    #allocation7 [shape = 's32[1]{0}', space=sflag, size = 0x4, scoped, tag = 'scoped memory for tpu_custom_call.1']
    #allocation8 [shape = 'u8[8192]{0}', space=vmem, size = 0x2000, scoped, tag = 'output window, operand 0']
    #allocation9 [shape = 'u8[24576]{0}', space=vmem, size = 0x6000, scoped, tag = 'output window, operand 1']
    #allocation10 [shape = 's32[2]{0}', space=sflag, size = 0x8, scoped, tag = 'scoped memory for tpu_custom_call.1']
    %14 = vsyncpa [#allocation4], 0
    %s15 = scalar_lea.sflag [#allocation4], 1
    %16 = vsyncpa %s15, 0
    %17 = vsyncpa [#allocation7], 0
    %18 = vsyncpa [#allocation5], 0
    %s19 = scalar_lea.sflag [#allocation5], 1
    %20 = vsyncpa %s19, 0
    %21 = vsyncpa [#allocation10], 0
    %s22 = scalar_lea.sflag [#allocation10], 1
    %23 = vsyncpa %s22, 0
    loop: start=0, step=1, limit=4
    $region2: #{tpu_custom_call.1} parent=1 // loop_pre_header
      _
    $region3: #{tpu_custom_call.1} parent=1 // loop_header
      %s25 = sphi 0, %s29
      %p26 = scmp.ge.s32.totalorder %s25, 4
      %s35 = sphi 0, %s37
      %s38 = sphi 0, %s35
      %s39 = sphi 0, %s38
      %s55 = sphi 0, %s39
      %s59 = sphi 0, %s59
      %s61 = sphi 0, %s59
      %s62 = sphi 0, %s61
      %s76 = sphi 0, %s62
      %s80 = sphi 0, %s80
      %s82 = sphi 0, %s80
      %s83 = sphi 0, %s82
      %s97 = sphi 0, %s83
      %s101 = sphi 0, %s101
      %s103 = sphi 0, %s101
      %s104 = sphi 0, %s103
      %s118 = sphi 0, %s104
      %s122 = sphi 0, %s122
      %s124 = sphi 0, %s122
      %s125 = sphi 0, %s124
      %s139 = sphi 0, %s125
      %s143 = sphi 0, %s143
      %s145 = sphi 0, %s143
      %s146 = sphi 0, %s145
      %s160 = sphi 0, %s146
      %s164 = sphi 0, %s164
      %s166 = sphi 0, %s164
      %s167 = sphi 0, %s166
      %s181 = sphi 0, %s167
      %s187 = sphi 0, %s189
      %s190 = sphi 0, %s187
      %s191 = sphi 0, %s190
      %s207 = sphi 0, %s191
      %s213 = sphi 0, %s215
      %s216 = sphi 0, %s213
      %s217 = sphi 0, %s216
      %s233 = sphi 0, %s217
    $region4: #{tpu_custom_call.1} parent=1 // loop_header_branch
      %28 = sbr.rel (%p26) target = $region8
    $region5: #{tpu_custom_call.1} parent=1 // loop_body
      %s30 = ssub.s32 %s25, 1
      %s31 = ssub.s32 %s25, 2
      %s32 = sadd.s32 %s25, 1
      %s33 = ssub.s32 %s25, %s32
      %p34 = scmp.eq.s32.totalorder %s33, 0
      %s36 = sadd.s32 %s35, 1
      %s37 = scalar_select %p34, %s35, %s36
      %p40 = pneg %p34
      %p41 = scmp.eq.s32.totalorder %s25, 1
      %p42 = por %p40, %p41
      %p43 = scmp.ne.s32.totalorder %s35, %s38
      %p44 = scmp.eq.s32.totalorder %s25, 0
      %p45 = por %p43, %p44
      %p46 = scmp.ne.s32.totalorder %s35, %s38
      %p47 = scmp.eq.s32.totalorder %s30, 1
      %p48 = por %p46, %p47
      %p49 = scmp.ne.s32.totalorder %s38, %s39
      %p50 = scmp.eq.s32.totalorder %s30, 0
      %p51 = por %p49, %p50
      %p52 = scmp.ne.s32.totalorder %s38, %s39
      %p53 = scmp.eq.s32.totalorder %s31, 1
      %p54 = por %p52, %p53
      %p56 = scmp.ne.s32.totalorder %s39, %s55
      %p57 = scmp.eq.s32.totalorder %s31, 0
      %p58 = por %p56, %p57
      %s60 = sadd.s32 %s59, 1
      %p63 = scmp.eq.s32.totalorder %s25, 1
      %p64 = scmp.ne.s32.totalorder %s59, %s61
      %p65 = scmp.eq.s32.totalorder %s25, 0
      %p66 = por %p64, %p65
      %p67 = scmp.ne.s32.totalorder %s59, %s61
      %p68 = scmp.eq.s32.totalorder %s30, 1
      %p69 = por %p67, %p68
      %p70 = scmp.ne.s32.totalorder %s61, %s62
      %p71 = scmp.eq.s32.totalorder %s30, 0
      %p72 = por %p70, %p71
      %p73 = scmp.ne.s32.totalorder %s61, %s62
      %p74 = scmp.eq.s32.totalorder %s31, 1
      %p75 = por %p73, %p74
      %p77 = scmp.ne.s32.totalorder %s62, %s76
      %p78 = scmp.eq.s32.totalorder %s31, 0
      %p79 = por %p77, %p78
      %s81 = sadd.s32 %s80, 1
      %p84 = scmp.eq.s32.totalorder %s25, 1
      %p85 = scmp.ne.s32.totalorder %s80, %s82
      %p86 = scmp.eq.s32.totalorder %s25, 0
      %p87 = por %p85, %p86
      %p88 = scmp.ne.s32.totalorder %s80, %s82
      %p89 = scmp.eq.s32.totalorder %s30, 1
      %p90 = por %p88, %p89
      %p91 = scmp.ne.s32.totalorder %s82, %s83
      %p92 = scmp.eq.s32.totalorder %s30, 0
      %p93 = por %p91, %p92
      %p94 = scmp.ne.s32.totalorder %s82, %s83
      %p95 = scmp.eq.s32.totalorder %s31, 1
      %p96 = por %p94, %p95
      %p98 = scmp.ne.s32.totalorder %s83, %s97
      %p99 = scmp.eq.s32.totalorder %s31, 0
      %p100 = por %p98, %p99
      %s102 = sadd.s32 %s101, 1
      %p105 = scmp.eq.s32.totalorder %s25, 1
      %p106 = scmp.ne.s32.totalorder %s101, %s103
      %p107 = scmp.eq.s32.totalorder %s25, 0
      %p108 = por %p106, %p107
      %p109 = scmp.ne.s32.totalorder %s101, %s103
      %p110 = scmp.eq.s32.totalorder %s30, 1
      %p111 = por %p109, %p110
      %p112 = scmp.ne.s32.totalorder %s103, %s104
      %p113 = scmp.eq.s32.totalorder %s30, 0
      %p114 = por %p112, %p113
      %p115 = scmp.ne.s32.totalorder %s103, %s104
      %p116 = scmp.eq.s32.totalorder %s31, 1
      %p117 = por %p115, %p116
      %p119 = scmp.ne.s32.totalorder %s104, %s118
      %p120 = scmp.eq.s32.totalorder %s31, 0
      %p121 = por %p119, %p120
      %s123 = sadd.s32 %s122, 1
      %p126 = scmp.eq.s32.totalorder %s25, 1
      %p127 = scmp.ne.s32.totalorder %s122, %s124
      %p128 = scmp.eq.s32.totalorder %s25, 0
      %p129 = por %p127, %p128
      %p130 = scmp.ne.s32.totalorder %s122, %s124
      %p131 = scmp.eq.s32.totalorder %s30, 1
      %p132 = por %p130, %p131
      %p133 = scmp.ne.s32.totalorder %s124, %s125
      %p134 = scmp.eq.s32.totalorder %s30, 0
      %p135 = por %p133, %p134
      %p136 = scmp.ne.s32.totalorder %s124, %s125
      %p137 = scmp.eq.s32.totalorder %s31, 1
      %p138 = por %p136, %p137
      %p140 = scmp.ne.s32.totalorder %s125, %s139
      %p141 = scmp.eq.s32.totalorder %s31, 0
      %p142 = por %p140, %p141
      %s144 = sadd.s32 %s143, 1
      %p147 = scmp.eq.s32.totalorder %s25, 1
      %p148 = scmp.ne.s32.totalorder %s143, %s145
      %p149 = scmp.eq.s32.totalorder %s25, 0
      %p150 = por %p148, %p149
      %p151 = scmp.ne.s32.totalorder %s143, %s145
      %p152 = scmp.eq.s32.totalorder %s30, 1
      %p153 = por %p151, %p152
      %p154 = scmp.ne.s32.totalorder %s145, %s146
      %p155 = scmp.eq.s32.totalorder %s30, 0
      %p156 = por %p154, %p155
      %p157 = scmp.ne.s32.totalorder %s145, %s146
      %p158 = scmp.eq.s32.totalorder %s31, 1
      %p159 = por %p157, %p158
      %p161 = scmp.ne.s32.totalorder %s146, %s160
      %p162 = scmp.eq.s32.totalorder %s31, 0
      %p163 = por %p161, %p162
      %s165 = sadd.s32 %s164, 1
      %p168 = scmp.eq.s32.totalorder %s25, 1
      %p169 = scmp.ne.s32.totalorder %s164, %s166
      %p170 = scmp.eq.s32.totalorder %s25, 0
      %p171 = por %p169, %p170
      %p172 = scmp.ne.s32.totalorder %s164, %s166
      %p173 = scmp.eq.s32.totalorder %s30, 1
      %p174 = por %p172, %p173
      %p175 = scmp.ne.s32.totalorder %s166, %s167
      %p176 = scmp.eq.s32.totalorder %s30, 0
      %p177 = por %p175, %p176
      %p178 = scmp.ne.s32.totalorder %s166, %s167
      %p179 = scmp.eq.s32.totalorder %s31, 1
      %p180 = por %p178, %p179
      %p182 = scmp.ne.s32.totalorder %s167, %s181
      %p183 = scmp.eq.s32.totalorder %s31, 0
      %p184 = por %p182, %p183
      %s185 = ssub.s32 %s25, %s32
      %p186 = scmp.eq.s32.totalorder %s185, 0
      %s188 = sadd.s32 %s187, 1
      %s189 = scalar_select %p186, %s187, %s188
      %p192 = pneg %p186
      %p193 = scmp.eq.s32.totalorder %s25, 1
      %p194 = por %p192, %p193
      %p195 = scmp.ne.s32.totalorder %s187, %s190
      %p196 = scmp.eq.s32.totalorder %s25, 0
      %p197 = por %p195, %p196
      %p198 = scmp.ne.s32.totalorder %s187, %s190
      %p199 = scmp.eq.s32.totalorder %s30, 1
      %p200 = por %p198, %p199
      %p201 = scmp.ne.s32.totalorder %s190, %s191
      %p202 = scmp.eq.s32.totalorder %s30, 0
      %p203 = por %p201, %p202
      %p204 = scmp.ne.s32.totalorder %s190, %s191
      %p205 = scmp.eq.s32.totalorder %s31, 1
      %p206 = por %p204, %p205
      %p208 = scmp.ne.s32.totalorder %s191, %s207
      %p209 = scmp.eq.s32.totalorder %s31, 0
      %p210 = por %p208, %p209
      %s211 = ssub.s32 %s25, %s32
      %p212 = scmp.eq.s32.totalorder %s211, 0
      %s214 = sadd.s32 %s213, 1
      %s215 = scalar_select %p212, %s213, %s214
      %p218 = pneg %p212
      %p219 = scmp.eq.s32.totalorder %s25, 1
      %p220 = por %p218, %p219
      %p221 = scmp.ne.s32.totalorder %s213, %s216
      %p222 = scmp.eq.s32.totalorder %s25, 0
      %p223 = por %p221, %p222
      %p224 = scmp.ne.s32.totalorder %s213, %s216
      %p225 = scmp.eq.s32.totalorder %s30, 1
      %p226 = por %p224, %p225
      %p227 = scmp.ne.s32.totalorder %s216, %s217
      %p228 = scmp.eq.s32.totalorder %s30, 0
      %p229 = por %p227, %p228
      %p230 = scmp.ne.s32.totalorder %s216, %s217
      %p231 = scmp.eq.s32.totalorder %s31, 1
      %p232 = por %p230, %p231
      %p234 = scmp.ne.s32.totalorder %s217, %s233
      %p235 = scmp.eq.s32.totalorder %s31, 0
      %p236 = por %p234, %p235
      %p237 = scmp.le.s32.totalorder 1, %s25
      %p238 = scmp.lt.s32.totalorder %s25, 3
      %p239 = pnand %p237, %p238
      %p240 = pneg %p239
      // Predicated region
      $region9: #{tpu_custom_call.1} parent=5 // pred_check
        _
      $region10: #{tpu_custom_call.1} parent=5 // pred_check_branch
        %242 = sbr.rel (%p239) target = $region12
      $region11: #{tpu_custom_call.1} parent=5 // pred_region
        %s243 = ssub.s32 %s25, 1
        // Predicated region
        $region13: #{tpu_custom_call.1} parent=11 // pred_check
          %p244 = pneg %p72
        $region14: #{tpu_custom_call.1} parent=11 // pred_check_branch
          %246 = sbr.rel (%p244) target = $region16
        $region15: #{tpu_custom_call.1} parent=11 // pred_region
          _
        $region16: #{tpu_custom_call.1} parent=11 // pred_fallthru
          _
        // Predicated region
        $region17: #{tpu_custom_call.1} parent=11 // pred_check
          %p247 = pneg %p93
        $region18: #{tpu_custom_call.1} parent=11 // pred_check_branch
          %249 = sbr.rel (%p247) target = $region20
        $region19: #{tpu_custom_call.1} parent=11 // pred_region
          _
        $region20: #{tpu_custom_call.1} parent=11 // pred_fallthru
          _
        // Predicated region
        $region21: #{tpu_custom_call.1} parent=11 // pred_check
          %p250 = pneg %p114
        $region22: #{tpu_custom_call.1} parent=11 // pred_check_branch
          %252 = sbr.rel (%p250) target = $region24
        $region23: #{tpu_custom_call.1} parent=11 // pred_region
          _
        $region24: #{tpu_custom_call.1} parent=11 // pred_fallthru
          _
        // Predicated region
        $region25: #{tpu_custom_call.1} parent=11 // pred_check
          %p253 = pneg %p135
        $region26: #{tpu_custom_call.1} parent=11 // pred_check_branch
          %255 = sbr.rel (%p253) target = $region28
        $region27: #{tpu_custom_call.1} parent=11 // pred_region
          _
        $region28: #{tpu_custom_call.1} parent=11 // pred_fallthru
          _
        // Predicated region
        $region29: #{tpu_custom_call.1} parent=11 // pred_check
          %p256 = pneg %p156
        $region30: #{tpu_custom_call.1} parent=11 // pred_check_branch
          %258 = sbr.rel (%p256) target = $region32
        $region31: #{tpu_custom_call.1} parent=11 // pred_region
          _
        $region32: #{tpu_custom_call.1} parent=11 // pred_fallthru
          _
        // Predicated region
        $region33: #{tpu_custom_call.1} parent=11 // pred_check
          %p259 = pneg %p177
        $region34: #{tpu_custom_call.1} parent=11 // pred_check_branch
          %261 = sbr.rel (%p259) target = $region36
        $region35: #{tpu_custom_call.1} parent=11 // pred_region
          %s263 = ssub.s32 4352, 4352
          %264 = vsyncadd [#allocation7], %s263
          %s265 = sshll.u32 [#allocation6], 4
          %s266 = int_to_ptr.vmem [resolvable:$true] %s265
          %271 = dma.hbm_to_vmem [thread:$0]  %s6, 4352, %s266, [#allocation7], 128, 128, 8
        $region36: #{tpu_custom_call.1} parent=11 // pred_fallthru
          _
      $region12: #{tpu_custom_call.1} parent=5 // pred_fallthru
        _
      %p272 = scmp.lt.s32.totalorder %s25, 2
      // Predicated region
      $region37: #{tpu_custom_call.1} parent=5 // pred_check
        %p273 = pneg %p272
      $region38: #{tpu_custom_call.1} parent=5 // pred_check_branch
        %275 = sbr.rel (%p273) target = $region40
      $region39: #{tpu_custom_call.1} parent=5 // pred_region
        // Predicated region
        $region41: #{tpu_custom_call.1} parent=39 // pred_check
          %p276 = pneg %p45
        $region42: #{tpu_custom_call.1} parent=39 // pred_check_branch
          %278 = sbr.rel (%p276) target = $region44
        $region43: #{tpu_custom_call.1} parent=39 // pred_region
          %s279 = sand.u32 %s35, 1
          %s280 = scalar_lea.sflag [#allocation4], %s279
          %s281 = sand.u32 %s35, 1
          %s282 = smul.addr %s281, 24
          %s283 = scalar_lea.vmem [#allocation3], %s282
          %s285 = ssub.s32 384, 384
          %286 = vsyncadd %s280, %s285
          %s287 = smul.addr %s25, 3
          %s288 = smul.addr %s287, 128
          %s289 = scalar_lea.hbm %s0, %s288
          %s291 = sshll.u32 %s283, 4
          %s292 = int_to_ptr.vmem [resolvable:$true] %s291
          %294 = dma.hbm_to_vmem [thread:$0]  %s289, 384, %s292, %s280
        $region44: #{tpu_custom_call.1} parent=39 // pred_fallthru
          _
      $region40: #{tpu_custom_call.1} parent=5 // pred_fallthru
        _
      %p295 = scmp.le.s32.totalorder 1, %s25
      %p296 = scmp.lt.s32.totalorder %s25, 3
      %p297 = pnand %p295, %p296
      %p298 = pneg %p297
      // Predicated region
      $region45: #{tpu_custom_call.1} parent=5 // pred_check
        _
      $region46: #{tpu_custom_call.1} parent=5 // pred_check_branch
        %300 = sbr.rel (%p297) target = $region48
      $region47: #{tpu_custom_call.1} parent=5 // pred_region
        %s301 = ssub.s32 %s25, 1
        %s302 = sand.u32 %s38, 1
        %s303 = scalar_lea.sflag [#allocation4], %s302
        %s304 = sand.u32 %s38, 1
        %s305 = smul.addr %s304, 24
        %s306 = scalar_lea.vmem [#allocation3], %s305
        // Predicated region
        $region49: #{tpu_custom_call.1} parent=47 // pred_check
          %p307 = pneg %p51
        $region50: #{tpu_custom_call.1} parent=47 // pred_check_branch
          %309 = sbr.rel (%p307) target = $region52
        $region51: #{tpu_custom_call.1} parent=47 // pred_region
          %310 = dma.done %s303, 384
        $region52: #{tpu_custom_call.1} parent=47 // pred_fallthru
          _
        // Predicated region
        $region53: #{tpu_custom_call.1} parent=47 // pred_check
          %p311 = pneg %p177
        $region54: #{tpu_custom_call.1} parent=47 // pred_check_branch
          %313 = sbr.rel (%p311) target = $region56
        $region55: #{tpu_custom_call.1} parent=47 // pred_region
          %314 = dma.done [#allocation7], 4352
        $region56: #{tpu_custom_call.1} parent=47 // pred_fallthru
          _
        %s315 = sand.u32 %s38, 1
        %s316 = scalar_lea.sflag [#allocation4], %s315
        %s317 = sand.u32 %s38, 1
        %s318 = smul.addr %s317, 24
        %s319 = scalar_lea.vmem [#allocation3], %s318
        %p320 = pneg %p51
        %p321 = pneg %p48
        %p322 = pneg %p72
        %p323 = pneg %p69
        %p324 = pneg %p93
        %p325 = pneg %p90
        %p326 = pneg %p114
        %p327 = pneg %p111
        %p328 = pneg %p135
        %p329 = pneg %p132
        %p330 = pneg %p156
        %p331 = pneg %p153
        %p332 = pneg %p177
        %p333 = pneg %p174
        %p334 = pneg %p203
        %p335 = pneg %p200
        %s336 = sand.u32 %s190, 1
        %s337 = scalar_lea.sflag [#allocation5], %s336
        %s338 = sand.u32 %s190, 1
        %s339 = smul.addr %s338, 8
        %s340 = scalar_lea.vmem [#allocation8], %s339
        %p341 = pneg %p229
        %p342 = pneg %p226
        %s343 = sand.u32 %s216, 1
        %s344 = scalar_lea.sflag [#allocation10], %s343
        %s345 = sand.u32 %s216, 1
        %s346 = smul.addr %s345, 24
        %s347 = scalar_lea.vmem [#allocation9], %s346
        %v348 = vld [vmem:[%s1] sm:$0xff]
        %v349 = vld [vmem:[%s3] sm:$0xff]
        %v350 = vld [vmem:[%s2] sm:$0xff]
        %v351 = vld [vmem:[%s4] sm:$0xff]
        %v352 = vld [vmem:[%s5] sm:$0x7]
        %v353 = vld [vmem:[#allocation6] sm:$0xff]
        %v354 = vld [vmem:[#allocation6 + $0x8] sm:$0xff]
        %v355 = vld [vmem:[#allocation6 + $0x10] sm:$0xff]
        %v356 = vld [vmem:[#allocation6 + $0x18] sm:$0xff]
        %v357 = vld [vmem:[#allocation6 + $0x20] sm:$0xff]
        %v358 = vld [vmem:[#allocation6 + $0x28] sm:$0xff]
        %v359 = vld [vmem:[#allocation6 + $0x30] sm:$0xff]
        %v360 = vld [vmem:[#allocation6 + $0x38] sm:$0xff]
        %v361 = vld [vmem:[#allocation6 + $0x40] sm:$0xff]
        %v362 = vld [vmem:[#allocation6 + $0x48] sm:$0xff]
        %v363 = vld [vmem:[#allocation6 + $0x50] sm:$0xff]
        %v364 = vld [vmem:[#allocation6 + $0x58] sm:$0xff]
        %v365 = vld [vmem:[#allocation6 + $0x60] sm:$0xff]
        %v366 = vld [vmem:[#allocation6 + $0x68] sm:$0xff]
        %v367 = vld [vmem:[#allocation6 + $0x70] sm:$0xff]
        %v368 = vld [vmem:[#allocation6 + $0x78] sm:$0xff]
        %v369 = vld [vmem:[#allocation6 + $0x80] sm:$0xff]
        %v370 = vld [vmem:[#allocation6 + $0x88] sm:$0xff]
        %v371 = vld [vmem:[#allocation6 + $0x90] sm:$0xff]
        %v372 = vld [vmem:[#allocation6 + $0x98] sm:$0xff]
        %v373 = vld [vmem:[#allocation6 + $0xa0] sm:$0xff]
        %v374 = vld [vmem:[#allocation6 + $0xa8] sm:$0xff]
        %v375 = vld [vmem:[#allocation6 + $0xb0] sm:$0xff]
        %v376 = vld [vmem:[#allocation6 + $0xb8] sm:$0xff]
        %v377 = vld [vmem:[#allocation6 + $0xc0] sm:$0xff]
        %v378 = vld [vmem:[#allocation6 + $0xc8] sm:$0xff]
        %v379 = vld [vmem:[#allocation6 + $0xd0] sm:$0xff]
        %v380 = vld [vmem:[#allocation6 + $0xd8] sm:$0xff]
        %v381 = vld [vmem:[#allocation6 + $0xe0] sm:$0xff]
        %v382 = vld [vmem:[#allocation6 + $0xe8] sm:$0xff]
        %v383 = vld [vmem:[#allocation6 + $0xf0] sm:$0xff]
        %v384 = vld [vmem:[#allocation6 + $0xf8] sm:$0xff]
        %v385 = vld [vmem:[#allocation6 + $0x100] sm:$0xff]
        %v386 = vld [vmem:[#allocation6 + $0x108] sm:$0x1f]
        %v387 = vld [vmem:[%s306] sm:$0xff]
        %v388 = vld [vmem:[%s306 + $0x8] sm:$0xff]
        %v389 = vld [vmem:[%s306 + $0x10] sm:$0xff]
        %393 = vrot.lane.b32.xlu0 %v387, 127
        %v394 = vpop.permute.xlu0 %393
        %395 = vrot.lane.b32.xlu0 %v388, 127
        %v396 = vpop.permute.xlu0 %395
        %397 = vrot.lane.b32.xlu0 %v389, 127
        %v398 = vpop.permute.xlu0 %397
        %vm399 = vcmask 1039360
        %v400 = vsel %vm399, %v394, %v396
        %v401 = vsel %vm399, %v396, %v398
        %405 = vrot.lane.b32.xlu0 %v387, 126
        %v406 = vpop.permute.xlu0 %405
        %407 = vrot.lane.b32.xlu0 %v388, 126
        %v408 = vpop.permute.xlu0 %407
        %409 = vrot.lane.b32.xlu0 %v389, 126
        %v410 = vpop.permute.xlu0 %409
        %vm411 = vcmask 1031168
        %v412 = vsel %vm411, %v406, %v408
        %v413 = vsel %vm411, %v408, %v410
        %417 = vrot.lane.b32.xlu0 %v387, 110
        %v418 = vpop.permute.xlu0 %417
        %419 = vrot.lane.b32.xlu0 %v388, 110
        %v420 = vpop.permute.xlu0 %419
        %421 = vrot.lane.b32.xlu0 %v389, 110
        %v422 = vpop.permute.xlu0 %421
        %vm423 = vcmask 900096
        %v424 = vsel %vm423, %v418, %v420
        %v425 = vsel %vm423, %v420, %v422
        %429 = vrot.lane.b32.xlu0 %v387, 109
        %v430 = vpop.permute.xlu0 %429
        %431 = vrot.lane.b32.xlu0 %v388, 109
        %v432 = vpop.permute.xlu0 %431
        %433 = vrot.lane.b32.xlu0 %v389, 109
        %v434 = vpop.permute.xlu0 %433
        %vm435 = vcmask 891904
        %v436 = vsel %vm435, %v430, %v432
        %v437 = vsel %vm435, %v432, %v434
        %441 = vrot.lane.b32.xlu0 %v387, 108
        %v442 = vpop.permute.xlu0 %441
        %443 = vrot.lane.b32.xlu0 %v388, 108
        %v444 = vpop.permute.xlu0 %443
        %445 = vrot.lane.b32.xlu0 %v389, 108
        %v446 = vpop.permute.xlu0 %445
        %vm447 = vcmask 883712
        %v448 = vsel %vm447, %v442, %v444
        %v449 = vsel %vm447, %v444, %v446
        %453 = vrot.lane.b32.xlu0 %v387, 92
        %v454 = vpop.permute.xlu0 %453
        %455 = vrot.lane.b32.xlu0 %v388, 92
        %v456 = vpop.permute.xlu0 %455
        %457 = vrot.lane.b32.xlu0 %v389, 92
        %v458 = vpop.permute.xlu0 %457
        %vm459 = vcmask 752640
        %v460 = vsel %vm459, %v454, %v456
        %v461 = vsel %vm459, %v456, %v458
        %465 = vrot.lane.b32.xlu0 %v387, 91
        %v466 = vpop.permute.xlu0 %465
        %467 = vrot.lane.b32.xlu0 %v388, 91
        %v468 = vpop.permute.xlu0 %467
        %469 = vrot.lane.b32.xlu0 %v389, 91
        %v470 = vpop.permute.xlu0 %469
        %vm471 = vcmask 744448
        %v472 = vsel %vm471, %v466, %v468
        %v473 = vsel %vm471, %v468, %v470
        %477 = vrot.lane.b32.xlu0 %v387, 90
        %v478 = vpop.permute.xlu0 %477
        %479 = vrot.lane.b32.xlu0 %v388, 90
        %v480 = vpop.permute.xlu0 %479
        %481 = vrot.lane.b32.xlu0 %v389, 90
        %v482 = vpop.permute.xlu0 %481
        %vm483 = vcmask 736256
        %v484 = vsel %vm483, %v478, %v480
        %v485 = vsel %vm483, %v480, %v482
        %490 = vset.pattern.permute.xlu0 0
        %491 = vperm.xlu0 %490, %v350
        %v492 = vpop.permute.xlu0 %491
        %vm494 = vcmask 588800
        %v496 = vsel %vm494, %v348, 0
        %498 = vmatprep.subr.mxu0 %v388
        %499 = vmatpush1.msra.mxu0 %v387
        %500 = vmatprep.subr.mxu0 %v401
        %501 = vmatpush1.msra.mxu0 %v400
        %502 = vmatprep.subr.mxu0 %v413
        %503 = vmatpush1.msra.mxu0 %v412
        %504 = vmatprep.subr.mxu0 %v425
        %505 = vmatpush1.msra.mxu0 %v424
        %506 = vmatprep.subr.mxu0 %v437
        %507 = vmatpush1.msra.mxu0 %v436
        %508 = vmatprep.subr.mxu0 %v449
        %509 = vmatpush1.msra.mxu0 %v448
        %510 = vmatprep.subr.mxu0 %v461
        %511 = vmatpush1.msra.mxu0 %v460
        %512 = vmatprep.subr.mxu0 %v473
        %513 = vmatpush1.msra.mxu0 %v472
        %514 = vmatprep.subr.mxu0 %v485
        %515 = vmatpush1.msra.mxu0 %v484
        %516 = vmatprep.subr.mxu0 0.0
        %517 = vmatpush1.msra.mxu0 0.0
        %518 = vmatprep.subr.mxu0 0.0
        %519 = vmatpush1.msra.mxu0 0.0
        %520 = vmatprep.subr.mxu0 0.0
        %521 = vmatpush1.msra.mxu0 0.0
        %522 = vmatprep.subr.mxu0 0.0
        %523 = vmatpush1.msra.mxu0 0.0
        %524 = vmatprep.subr.mxu0 0.0
        %525 = vmatpush1.msra.mxu0 0.0
        %526 = vmatprep.subr.mxu0 0.0
        %527 = vmatpush1.msra.mxu0 0.0
        %528 = vmatprep.subr.mxu0 0.0
        %529 = vmatpush1.msra.mxu0 0.0
        %530 = vmatprep.subr.mxu0 0.0
        %531 = vmatpush1.msra.mxu0 0.0
        %532 = vmatprep.subr.mxu0 0.0
        %533 = vmatpush1.msra.mxu0 0.0
        %534 = vmatprep.subr.mxu0 0.0
        %535 = vmatpush1.msra.mxu0 0.0
        %536 = vmatprep.subr.mxu0 0.0
        %537 = vmatpush1.msra.mxu0 0.0
        %538 = vmatprep.subr.mxu0 0.0
        %539 = vmatpush1.msra.mxu0 0.0
        %540 = vmatprep.subr.mxu0 0.0
        %541 = vmatpush1.msra.mxu0 0.0
        %542 = vmatprep.subr.mxu0 0.0
        %543 = vmatpush1.msra.mxu0 0.0
        %544 = vmatprep.subr.mxu0 0.0
        %545 = vmatpush1.msra.mxu0 0.0
        %546 = vmatprep.subr.mxu0 0.0
        %547 = vmatpush1.msra.mxu0 0.0
        %548 = vmatprep.subr.mxu0 0.0
        %549 = vmatpush1.msra.mxu0 0.0
        %550 = vmatprep.subr.mxu0 0.0
        %551 = vmatpush1.msra.mxu0 0.0
        %552 = vmatprep.subr.mxu0 0.0
        %553 = vmatpush1.msra.mxu0 0.0
        %554 = vmatprep.subr.mxu0 0.0
        %555 = vmatpush1.msra.mxu0 0.0
        %556 = vmatprep.subr.mxu0 0.0
        %557 = vmatpush1.msra.mxu0 0.0
        %558 = vmatprep.subr.mxu0 0.0
        %559 = vmatpush1.msra.mxu0 0.0
        %560 = vmatprep.subr.mxu0 0.0
        %561 = vmatpush1.msra.mxu0 0.0
        %562 = vmatprep.mubr.f32.mxu0 0.0
        %563 = vmatmul.mubr.f32.gmra.mrb[0].mxu0 %v496
        %v564 = vpop.f32.mrb[0].mxu0
        %v565 = vadd.f32 %v492, %v564
        %v566 = vpop.f32.mrb[0].mxu0
        %v567 = vadd.f32 %v492, %v566
        %568 = vdwg.mxu0
        %569 = vmatprep.subr.mxu0 0.0
        %570 = vmatpush1.msra.mxu0 %v389
        %571 = vmatprep.subr.mxu0 0.0
        %572 = vmatpush1.msra.mxu0 %v398
        %573 = vmatprep.subr.mxu0 0.0
        %574 = vmatpush1.msra.mxu0 %v410
        %575 = vmatprep.subr.mxu0 0.0
        %576 = vmatpush1.msra.mxu0 %v422
        %577 = vmatprep.subr.mxu0 0.0
        %578 = vmatpush1.msra.mxu0 %v434
        %579 = vmatprep.subr.mxu0 0.0
        %580 = vmatpush1.msra.mxu0 %v446
        %581 = vmatprep.subr.mxu0 0.0
        %582 = vmatpush1.msra.mxu0 %v458
        %583 = vmatprep.subr.mxu0 0.0
        %584 = vmatpush1.msra.mxu0 %v470
        %585 = vmatprep.subr.mxu0 0.0
        %586 = vmatpush1.msra.mxu0 %v482
        %587 = vmatprep.subr.mxu0 0.0
        %588 = vmatpush1.msra.mxu0 0.0
        %589 = vmatprep.subr.mxu0 0.0
        %590 = vmatpush1.msra.mxu0 0.0
        %591 = vmatprep.subr.mxu0 0.0
        %592 = vmatpush1.msra.mxu0 0.0
        %593 = vmatprep.subr.mxu0 0.0
        %594 = vmatpush1.msra.mxu0 0.0
        %595 = vmatprep.subr.mxu0 0.0
        %596 = vmatpush1.msra.mxu0 0.0
        %597 = vmatprep.subr.mxu0 0.0
        %598 = vmatpush1.msra.mxu0 0.0
        %599 = vmatprep.subr.mxu0 0.0
        %600 = vmatpush1.msra.mxu0 0.0
        %601 = vmatprep.subr.mxu0 0.0
        %602 = vmatpush1.msra.mxu0 0.0
        %603 = vmatprep.subr.mxu0 0.0
        %604 = vmatpush1.msra.mxu0 0.0
        %605 = vmatprep.subr.mxu0 0.0
        %606 = vmatpush1.msra.mxu0 0.0
        %607 = vmatprep.subr.mxu0 0.0
        %608 = vmatpush1.msra.mxu0 0.0
        %609 = vmatprep.subr.mxu0 0.0
        %610 = vmatpush1.msra.mxu0 0.0
        %611 = vmatprep.subr.mxu0 0.0
        %612 = vmatpush1.msra.mxu0 0.0
        %613 = vmatprep.subr.mxu0 0.0
        %614 = vmatpush1.msra.mxu0 0.0
        %615 = vmatprep.subr.mxu0 0.0
        %616 = vmatpush1.msra.mxu0 0.0
        %617 = vmatprep.subr.mxu0 0.0
        %618 = vmatpush1.msra.mxu0 0.0
        %619 = vmatprep.subr.mxu0 0.0
        %620 = vmatpush1.msra.mxu0 0.0
        %621 = vmatprep.subr.mxu0 0.0
        %622 = vmatpush1.msra.mxu0 0.0
        %623 = vmatprep.subr.mxu0 0.0
        %624 = vmatpush1.msra.mxu0 0.0
        %625 = vmatprep.subr.mxu0 0.0
        %626 = vmatpush1.msra.mxu0 0.0
        %627 = vmatprep.subr.mxu0 0.0
        %628 = vmatpush1.msra.mxu0 0.0
        %629 = vmatprep.subr.mxu0 0.0
        %630 = vmatpush1.msra.mxu0 0.0
        %631 = vmatprep.subr.mxu0 0.0
        %632 = vmatpush1.msra.mxu0 0.0
        %633 = vmatprep.mubr.f32.mxu0 0.0
        %634 = vmatmul.mubr.f32.gmra.mrb[0].mxu0 %v496
        %v635 = vpop.f32.mrb[0].mxu0
        %v636 = vadd.f32 %v492, %v635
        %v637 = vpop.f32.mrb[0].mxu0
        %638 = vdwg.mxu0
        %v639 = vmax.f32 %v565, 0.0
        %v640 = vmax.f32 %v567, 0.0
        %v641 = vmax.f32 %v636, 0.0
        %v643 = vlaneseq
        %v644 = vshrl.u32 %v643, 7
        %v645 = vsub.s32 0, %v644
        %v646 = vrot.slane %v352, %v645
        %v647 = vlaneseq
        %v648 = vshrl.u32 %v647, 7
        %v649 = vsub.s32 1, %v648
        %v650 = vrot.slane %v352, %v649
        %v651 = vlaneseq
        %v652 = vshrl.u32 %v651, 7
        %v653 = vsub.s32 2, %v652
        %v654 = vrot.slane %v352, %v653
        %v658 = vmul.f32 %v639, %v646
        %v659 = vmul.f32 %v640, %v650
        %v660 = vmul.f32 %v641, %v654
        %661 = vst [vmem:[#allocation2] sm:$0xff] 0.0
        %662 = vst [vmem:[#allocation2 + $0x8] sm:$0xff] 0.0
        %vm663 = vcmask 572416
        %664 = vst.msk [vmem:[#allocation2 + $0x10] sm:$0xff] %vm663, 0.0
        %668 = vrot.lane.b32.xlu0 %v658, 19
        %v669 = vpop.permute.xlu0 %668
        %670 = vrot.lane.b32.xlu0 %v659, 19
        %v671 = vpop.permute.xlu0 %670
        %672 = vrot.lane.b32.xlu0 %v660, 19
        %v673 = vpop.permute.xlu0 %672
        %vm674 = vcmask 154624
        %v675 = vsel %vm674, %v669, %v671
        %v676 = vsel %vm674, %v671, %v673
        %vm680 = vcmask 1047704
        %681 = vst.msk [vmem:[#allocation2] sm:$0xff] %vm680, %v669
        %682 = vst [vmem:[#allocation2 + $0x8] sm:$0xff] %v675
        %vm683 = vcmask 416768
        %684 = vst.msk [vmem:[#allocation2 + $0x10] sm:$0xff] %vm683, %v676
        %v685 = vld [vmem:[#allocation2] sm:$0xff]
        %v686 = vld [vmem:[#allocation2 + $0x8] sm:$0xff]
        %v687 = vld [vmem:[#allocation2 + $0x10] sm:$0xff]
        %691 = vrot.lane.b32.xlu0 %v685, 127
        %v692 = vpop.permute.xlu0 %691
        %693 = vrot.lane.b32.xlu0 %v686, 127
        %v694 = vpop.permute.xlu0 %693
        %695 = vrot.lane.b32.xlu0 %v687, 127
        %v696 = vpop.permute.xlu0 %695
        %v697 = vsel %vm399, %v692, %v694
        %v698 = vsel %vm399, %v694, %v696
        %702 = vrot.lane.b32.xlu0 %v685, 126
        %v703 = vpop.permute.xlu0 %702
        %704 = vrot.lane.b32.xlu0 %v686, 126
        %v705 = vpop.permute.xlu0 %704
        %706 = vrot.lane.b32.xlu0 %v687, 126
        %v707 = vpop.permute.xlu0 %706
        %v708 = vsel %vm411, %v703, %v705
        %v709 = vsel %vm411, %v705, %v707
        %713 = vrot.lane.b32.xlu0 %v685, 110
        %v714 = vpop.permute.xlu0 %713
        %715 = vrot.lane.b32.xlu0 %v686, 110
        %v716 = vpop.permute.xlu0 %715
        %717 = vrot.lane.b32.xlu0 %v687, 110
        %v718 = vpop.permute.xlu0 %717
        %v719 = vsel %vm423, %v714, %v716
        %v720 = vsel %vm423, %v716, %v718
        %724 = vrot.lane.b32.xlu0 %v685, 109
        %v725 = vpop.permute.xlu0 %724
        %726 = vrot.lane.b32.xlu0 %v686, 109
        %v727 = vpop.permute.xlu0 %726
        %728 = vrot.lane.b32.xlu0 %v687, 109
        %v729 = vpop.permute.xlu0 %728
        %v730 = vsel %vm435, %v725, %v727
        %v731 = vsel %vm435, %v727, %v729
        %735 = vrot.lane.b32.xlu0 %v685, 108
        %v736 = vpop.permute.xlu0 %735
        %737 = vrot.lane.b32.xlu0 %v686, 108
        %v738 = vpop.permute.xlu0 %737
        %739 = vrot.lane.b32.xlu0 %v687, 108
        %v740 = vpop.permute.xlu0 %739
        %v741 = vsel %vm447, %v736, %v738
        %v742 = vsel %vm447, %v738, %v740
        %746 = vrot.lane.b32.xlu0 %v685, 92
        %v747 = vpop.permute.xlu0 %746
        %748 = vrot.lane.b32.xlu0 %v686, 92
        %v749 = vpop.permute.xlu0 %748
        %750 = vrot.lane.b32.xlu0 %v687, 92
        %v751 = vpop.permute.xlu0 %750
        %v752 = vsel %vm459, %v747, %v749
        %v753 = vsel %vm459, %v749, %v751
        %757 = vrot.lane.b32.xlu0 %v685, 91
        %v758 = vpop.permute.xlu0 %757
        %759 = vrot.lane.b32.xlu0 %v686, 91
        %v760 = vpop.permute.xlu0 %759
        %761 = vrot.lane.b32.xlu0 %v687, 91
        %v762 = vpop.permute.xlu0 %761
        %v763 = vsel %vm471, %v758, %v760
        %v764 = vsel %vm471, %v760, %v762
        %768 = vrot.lane.b32.xlu0 %v685, 90
        %v769 = vpop.permute.xlu0 %768
        %770 = vrot.lane.b32.xlu0 %v686, 90
        %v771 = vpop.permute.xlu0 %770
        %772 = vrot.lane.b32.xlu0 %v687, 90
        %v773 = vpop.permute.xlu0 %772
        %v774 = vsel %vm483, %v769, %v771
        %v775 = vsel %vm483, %v771, %v773
        %780 = vset.pattern.permute.xlu0 0
        %781 = vperm.xlu0 %780, %v351
        %v782 = vpop.permute.xlu0 %781
        %v785 = vsel %vm494, %v349, 0
        %787 = vmatprep.subr.mxu0 %v686
        %788 = vmatpush1.msra.mxu0 %v685
        %789 = vmatprep.subr.mxu0 %v698
        %790 = vmatpush1.msra.mxu0 %v697
        %791 = vmatprep.subr.mxu0 %v709
        %792 = vmatpush1.msra.mxu0 %v708
        %793 = vmatprep.subr.mxu0 %v720
        %794 = vmatpush1.msra.mxu0 %v719
        %795 = vmatprep.subr.mxu0 %v731
        %796 = vmatpush1.msra.mxu0 %v730
        %797 = vmatprep.subr.mxu0 %v742
        %798 = vmatpush1.msra.mxu0 %v741
        %799 = vmatprep.subr.mxu0 %v753
        %800 = vmatpush1.msra.mxu0 %v752
        %801 = vmatprep.subr.mxu0 %v764
        %802 = vmatpush1.msra.mxu0 %v763
        %803 = vmatprep.subr.mxu0 %v775
        %804 = vmatpush1.msra.mxu0 %v774
        %805 = vmatprep.subr.mxu0 0.0
        %806 = vmatpush1.msra.mxu0 0.0
        %807 = vmatprep.subr.mxu0 0.0
        %808 = vmatpush1.msra.mxu0 0.0
        %809 = vmatprep.subr.mxu0 0.0
        %810 = vmatpush1.msra.mxu0 0.0
        %811 = vmatprep.subr.mxu0 0.0
        %812 = vmatpush1.msra.mxu0 0.0
        %813 = vmatprep.subr.mxu0 0.0
        %814 = vmatpush1.msra.mxu0 0.0
        %815 = vmatprep.subr.mxu0 0.0
        %816 = vmatpush1.msra.mxu0 0.0
        %817 = vmatprep.subr.mxu0 0.0
        %818 = vmatpush1.msra.mxu0 0.0
        %819 = vmatprep.subr.mxu0 0.0
        %820 = vmatpush1.msra.mxu0 0.0
        %821 = vmatprep.subr.mxu0 0.0
        %822 = vmatpush1.msra.mxu0 0.0
        %823 = vmatprep.subr.mxu0 0.0
        %824 = vmatpush1.msra.mxu0 0.0
        %825 = vmatprep.subr.mxu0 0.0
        %826 = vmatpush1.msra.mxu0 0.0
        %827 = vmatprep.subr.mxu0 0.0
        %828 = vmatpush1.msra.mxu0 0.0
        %829 = vmatprep.subr.mxu0 0.0
        %830 = vmatpush1.msra.mxu0 0.0
        %831 = vmatprep.subr.mxu0 0.0
        %832 = vmatpush1.msra.mxu0 0.0
        %833 = vmatprep.subr.mxu0 0.0
        %834 = vmatpush1.msra.mxu0 0.0
        %835 = vmatprep.subr.mxu0 0.0
        %836 = vmatpush1.msra.mxu0 0.0
        %837 = vmatprep.subr.mxu0 0.0
        %838 = vmatpush1.msra.mxu0 0.0
        %839 = vmatprep.subr.mxu0 0.0
        %840 = vmatpush1.msra.mxu0 0.0
        %841 = vmatprep.subr.mxu0 0.0
        %842 = vmatpush1.msra.mxu0 0.0
        %843 = vmatprep.subr.mxu0 0.0
        %844 = vmatpush1.msra.mxu0 0.0
        %845 = vmatprep.subr.mxu0 0.0
        %846 = vmatpush1.msra.mxu0 0.0
        %847 = vmatprep.subr.mxu0 0.0
        %848 = vmatpush1.msra.mxu0 0.0
        %849 = vmatprep.subr.mxu0 0.0
        %850 = vmatpush1.msra.mxu0 0.0
        %851 = vmatprep.mubr.f32.mxu0 0.0
        %852 = vmatmul.mubr.f32.gmra.mrb[0].mxu0 %v785
        %v853 = vpop.f32.mrb[0].mxu0
        %v854 = vadd.f32 %v782, %v853
        %v855 = vpop.f32.mrb[0].mxu0
        %v856 = vadd.f32 %v782, %v855
        %857 = vdwg.mxu0
        %858 = vmatprep.subr.mxu0 0.0
        %859 = vmatpush1.msra.mxu0 %v687
        %860 = vmatprep.subr.mxu0 0.0
        %861 = vmatpush1.msra.mxu0 %v696
        %862 = vmatprep.subr.mxu0 0.0
        %863 = vmatpush1.msra.mxu0 %v707
        %864 = vmatprep.subr.mxu0 0.0
        %865 = vmatpush1.msra.mxu0 %v718
        %866 = vmatprep.subr.mxu0 0.0
        %867 = vmatpush1.msra.mxu0 %v729
        %868 = vmatprep.subr.mxu0 0.0
        %869 = vmatpush1.msra.mxu0 %v740
        %870 = vmatprep.subr.mxu0 0.0
        %871 = vmatpush1.msra.mxu0 %v751
        %872 = vmatprep.subr.mxu0 0.0
        %873 = vmatpush1.msra.mxu0 %v762
        %874 = vmatprep.subr.mxu0 0.0
        %875 = vmatpush1.msra.mxu0 %v773
        %876 = vmatprep.subr.mxu0 0.0
        %877 = vmatpush1.msra.mxu0 0.0
        %878 = vmatprep.subr.mxu0 0.0
        %879 = vmatpush1.msra.mxu0 0.0
        %880 = vmatprep.subr.mxu0 0.0
        %881 = vmatpush1.msra.mxu0 0.0
        %882 = vmatprep.subr.mxu0 0.0
        %883 = vmatpush1.msra.mxu0 0.0
        %884 = vmatprep.subr.mxu0 0.0
        %885 = vmatpush1.msra.mxu0 0.0
        %886 = vmatprep.subr.mxu0 0.0
        %887 = vmatpush1.msra.mxu0 0.0
        %888 = vmatprep.subr.mxu0 0.0
        %889 = vmatpush1.msra.mxu0 0.0
        %890 = vmatprep.subr.mxu0 0.0
        %891 = vmatpush1.msra.mxu0 0.0
        %892 = vmatprep.subr.mxu0 0.0
        %893 = vmatpush1.msra.mxu0 0.0
        %894 = vmatprep.subr.mxu0 0.0
        %895 = vmatpush1.msra.mxu0 0.0
        %896 = vmatprep.subr.mxu0 0.0
        %897 = vmatpush1.msra.mxu0 0.0
        %898 = vmatprep.subr.mxu0 0.0
        %899 = vmatpush1.msra.mxu0 0.0
        %900 = vmatprep.subr.mxu0 0.0
        %901 = vmatpush1.msra.mxu0 0.0
        %902 = vmatprep.subr.mxu0 0.0
        %903 = vmatpush1.msra.mxu0 0.0
        %904 = vmatprep.subr.mxu0 0.0
        %905 = vmatpush1.msra.mxu0 0.0
        %906 = vmatprep.subr.mxu0 0.0
        %907 = vmatpush1.msra.mxu0 0.0
        %908 = vmatprep.subr.mxu0 0.0
        %909 = vmatpush1.msra.mxu0 0.0
        %910 = vmatprep.subr.mxu0 0.0
        %911 = vmatpush1.msra.mxu0 0.0
        %912 = vmatprep.subr.mxu0 0.0
        %913 = vmatpush1.msra.mxu0 0.0
        %914 = vmatprep.subr.mxu0 0.0
        %915 = vmatpush1.msra.mxu0 0.0
        %916 = vmatprep.subr.mxu0 0.0
        %917 = vmatpush1.msra.mxu0 0.0
        %918 = vmatprep.subr.mxu0 0.0
        %919 = vmatpush1.msra.mxu0 0.0
        %920 = vmatprep.subr.mxu0 0.0
        %921 = vmatpush1.msra.mxu0 0.0
        %922 = vmatprep.mubr.f32.mxu0 0.0
        %923 = vmatmul.mubr.f32.gmra.mrb[0].mxu0 %v785
        %v924 = vpop.f32.mrb[0].mxu0
        %v925 = vadd.f32 %v782, %v924
        %v926 = vpop.f32.mrb[0].mxu0
        %927 = vdwg.mxu0
        %v928 = vmax.f32 %v854, 0.0
        %v929 = vmax.f32 %v856, 0.0
        %v930 = vmax.f32 %v925, 0.0
        %931 = vst [vmem:[%s347] sm:$0xff] %v928
        %932 = vst [vmem:[%s347 + $0x8] sm:$0xff] %v929
        %vm933 = vcmask 261120
        %934 = vst.msk [vmem:[%s347 + $0x10] sm:$0xff] %vm933, %v930
        %938 = vrot.lane.b32.xlu0 %v928, 127
        %v939 = vpop.permute.xlu0 %938
        %940 = vrot.lane.b32.xlu0 %v929, 127
        %v941 = vpop.permute.xlu0 %940
        %942 = vrot.lane.b32.xlu0 %v930, 127
        %v943 = vpop.permute.xlu0 %942
        %v944 = vsel %vm399, %v939, %v941
        %v945 = vsel %vm399, %v941, %v943
        %v949 = vmax.f32 %v928, %v944
        %v950 = vmax.f32 %v929, %v945
        %v951 = vmax.f32 %v930, %v943
        %955 = vrot.lane.b32.xlu0 %v949, 110
        %v956 = vpop.permute.xlu0 %955
        %957 = vrot.lane.b32.xlu0 %v950, 110
        %v958 = vpop.permute.xlu0 %957
        %959 = vrot.lane.b32.xlu0 %v951, 110
        %v960 = vpop.permute.xlu0 %959
        %v961 = vsel %vm423, %v956, %v958
        %v962 = vsel %vm423, %v958, %v960
        %v966 = vmax.f32 %v949, %v961
        %v967 = vmax.f32 %v950, %v962
        %v968 = vmax.f32 %v951, %v960
        %vm969 = vcmask 105472
        %v971 = vsel %vm969, %v968, 0
        %vm973 = vcmask 1044480
        %v975 = vsel %vm973, %v386, 0
        %977 = vmatprep.subr.mxu0 0.0
        %978 = vmatpush1.msra.mxu0 %v353
        %979 = vmatprep.subr.mxu0 0.0
        %980 = vmatpush1.msra.mxu0 %v354
        %981 = vmatprep.subr.mxu0 0.0
        %982 = vmatpush1.msra.mxu0 %v355
        %983 = vmatprep.subr.mxu0 0.0
        %984 = vmatpush1.msra.mxu0 %v356
        %985 = vmatprep.subr.mxu0 0.0
        %986 = vmatpush1.msra.mxu0 %v357
        %987 = vmatprep.subr.mxu0 0.0
        %988 = vmatpush1.msra.mxu0 %v358
        %989 = vmatprep.subr.mxu0 0.0
        %990 = vmatpush1.msra.mxu0 %v359
        %991 = vmatprep.subr.mxu0 0.0
        %992 = vmatpush1.msra.mxu0 %v360
        %993 = vmatprep.subr.mxu0 0.0
        %994 = vmatpush1.msra.mxu0 %v361
        %995 = vmatprep.subr.mxu0 0.0
        %996 = vmatpush1.msra.mxu0 %v362
        %997 = vmatprep.subr.mxu0 0.0
        %998 = vmatpush1.msra.mxu0 %v363
        %999 = vmatprep.subr.mxu0 0.0
        %1000 = vmatpush1.msra.mxu0 %v364
        %1001 = vmatprep.subr.mxu0 0.0
        %1002 = vmatpush1.msra.mxu0 %v365
        %1003 = vmatprep.subr.mxu0 0.0
        %1004 = vmatpush1.msra.mxu0 %v366
        %1005 = vmatprep.subr.mxu0 0.0
        %1006 = vmatpush1.msra.mxu0 %v367
        %1007 = vmatprep.subr.mxu0 0.0
        %1008 = vmatpush1.msra.mxu0 %v368
        %1009 = vmatprep.subr.mxu0 0.0
        %1010 = vmatpush1.msra.mxu0 %v369
        %1011 = vmatprep.subr.mxu0 0.0
        %1012 = vmatpush1.msra.mxu0 %v370
        %1013 = vmatprep.subr.mxu0 0.0
        %1014 = vmatpush1.msra.mxu0 %v371
        %1015 = vmatprep.subr.mxu0 0.0
        %1016 = vmatpush1.msra.mxu0 %v372
        %1017 = vmatprep.subr.mxu0 0.0
        %1018 = vmatpush1.msra.mxu0 %v373
        %1019 = vmatprep.subr.mxu0 0.0
        %1020 = vmatpush1.msra.mxu0 %v374
        %1021 = vmatprep.subr.mxu0 0.0
        %1022 = vmatpush1.msra.mxu0 %v375
        %1023 = vmatprep.subr.mxu0 0.0
        %1024 = vmatpush1.msra.mxu0 %v376
        %1025 = vmatprep.subr.mxu0 0.0
        %1026 = vmatpush1.msra.mxu0 %v377
        %1027 = vmatprep.subr.mxu0 0.0
        %1028 = vmatpush1.msra.mxu0 %v378
        %1029 = vmatprep.subr.mxu0 0.0
        %1030 = vmatpush1.msra.mxu0 %v379
        %1031 = vmatprep.subr.mxu0 0.0
        %1032 = vmatpush1.msra.mxu0 %v380
        %1033 = vmatprep.subr.mxu0 0.0
        %1034 = vmatpush1.msra.mxu0 %v381
        %1035 = vmatprep.subr.mxu0 0.0
        %1036 = vmatpush1.msra.mxu0 %v382
        %1037 = vmatprep.subr.mxu0 0.0
        %1038 = vmatpush1.msra.mxu0 %v383
        %1039 = vmatprep.subr.mxu0 0.0
        %1040 = vmatpush1.msra.mxu0 %v384
        %1041 = vmatprep.mubr.f32.mxu0 %v967
        %1042 = vmatmul.mubr.f32.gmra.mrb[0].mxu0 %v966
        %v1043 = vpop.f32.mrb[0].mxu0
        %v1044 = vadd.f32 0.0, %v1043
        %v1045 = vpop.f32.mrb[0].mxu0
        %1046 = vdwg.mxu0
        %1047 = vmatprep.subr.mxu0 0.0
        %1048 = vmatpush1.msra.mxu0 %v385
        %1049 = vmatprep.subr.mxu0 0.0
        %1050 = vmatpush1.msra.mxu0 %v975
        %1051 = vmatprep.subr.mxu0 0.0
        %1052 = vmatpush1.msra.mxu0 0.0
        %1053 = vmatprep.subr.mxu0 0.0
        %1054 = vmatpush1.msra.mxu0 0.0
        %1055 = vmatprep.subr.mxu0 0.0
        %1056 = vmatpush1.msra.mxu0 0.0
        %1057 = vmatprep.subr.mxu0 0.0
        %1058 = vmatpush1.msra.mxu0 0.0
        %1059 = vmatprep.subr.mxu0 0.0
        %1060 = vmatpush1.msra.mxu0 0.0
        %1061 = vmatprep.subr.mxu0 0.0
        %1062 = vmatpush1.msra.mxu0 0.0
        %1063 = vmatprep.subr.mxu0 0.0
        %1064 = vmatpush1.msra.mxu0 0.0
        %1065 = vmatprep.subr.mxu0 0.0
        %1066 = vmatpush1.msra.mxu0 0.0
        %1067 = vmatprep.subr.mxu0 0.0
        %1068 = vmatpush1.msra.mxu0 0.0
        %1069 = vmatprep.subr.mxu0 0.0
        %1070 = vmatpush1.msra.mxu0 0.0
        %1071 = vmatprep.subr.mxu0 0.0
        %1072 = vmatpush1.msra.mxu0 0.0
        %1073 = vmatprep.subr.mxu0 0.0
        %1074 = vmatpush1.msra.mxu0 0.0
        %1075 = vmatprep.subr.mxu0 0.0
        %1076 = vmatpush1.msra.mxu0 0.0
        %1077 = vmatprep.subr.mxu0 0.0
        %1078 = vmatpush1.msra.mxu0 0.0
        %1079 = vmatprep.subr.mxu0 0.0
        %1080 = vmatpush1.msra.mxu0 0.0
        %1081 = vmatprep.subr.mxu0 0.0
        %1082 = vmatpush1.msra.mxu0 0.0
        %1083 = vmatprep.subr.mxu0 0.0
        %1084 = vmatpush1.msra.mxu0 0.0
        %1085 = vmatprep.subr.mxu0 0.0
        %1086 = vmatpush1.msra.mxu0 0.0
        %1087 = vmatprep.subr.mxu0 0.0
        %1088 = vmatpush1.msra.mxu0 0.0
        %1089 = vmatprep.subr.mxu0 0.0
        %1090 = vmatpush1.msra.mxu0 0.0
        %1091 = vmatprep.subr.mxu0 0.0
        %1092 = vmatpush1.msra.mxu0 0.0
        %1093 = vmatprep.subr.mxu0 0.0
        %1094 = vmatpush1.msra.mxu0 0.0
        %1095 = vmatprep.subr.mxu0 0.0
        %1096 = vmatpush1.msra.mxu0 0.0
        %1097 = vmatprep.subr.mxu0 0.0
        %1098 = vmatpush1.msra.mxu0 0.0
        %1099 = vmatprep.subr.mxu0 0.0
        %1100 = vmatpush1.msra.mxu0 0.0
        %1101 = vmatprep.subr.mxu0 0.0
        %1102 = vmatpush1.msra.mxu0 0.0
        %1103 = vmatprep.subr.mxu0 0.0
        %1104 = vmatpush1.msra.mxu0 0.0
        %1105 = vmatprep.subr.mxu0 0.0
        %1106 = vmatpush1.msra.mxu0 0.0
        %1107 = vmatprep.subr.mxu0 0.0
        %1108 = vmatpush1.msra.mxu0 0.0
        %1109 = vmatprep.subr.mxu0 0.0
        %1110 = vmatpush1.msra.mxu0 0.0
        %1111 = vmatprep.mubr.f32.mxu0 0.0
        %1112 = vmatmul.mubr.f32.gmra.mrb[0].mxu0 %v971
        %v1113 = vpop.f32.mrb[0].mxu0
        %v1114 = vadd.f32 %v1044, %v1113
        %v1115 = vpop.f32.mrb[0].mxu0
        %1116 = vdwg.mxu0
        %1117 = vst [vmem:[%s340] sm:$0xff] %v1114
        %s1118 = sand.u32 %s190, 1
        %s1119 = scalar_lea.sflag [#allocation5], %s1118
        %s1120 = sand.u32 %s190, 1
        %s1121 = smul.addr %s1120, 8
        %s1122 = scalar_lea.vmem [#allocation8], %s1121
        %s1123 = sand.u32 %s216, 1
        %s1124 = scalar_lea.sflag [#allocation10], %s1123
        %s1125 = sand.u32 %s216, 1
        %s1126 = smul.addr %s1125, 24
        %s1127 = scalar_lea.vmem [#allocation9], %s1126
        // Predicated region
        $region57: #{tpu_custom_call.1} parent=47 // pred_check
          %p1128 = pneg %p200
        $region58: #{tpu_custom_call.1} parent=47 // pred_check_branch
          %1130 = sbr.rel (%p1128) target = $region60
        $region59: #{tpu_custom_call.1} parent=47 // pred_region
          %s1132 = ssub.s32 128, 128
          %1133 = vsyncadd %s1119, %s1132
          %s1134 = smul.addr %s30, 128
          %s1135 = scalar_lea.hbm %s7, %s1134
          %s1137 = sshll.u32 %s1122, 4
          %s1138 = int_to_ptr.vmem [resolvable:$true] %s1137
          %1140 = dma.vmem_to_hbm [thread:$0]  %s1138, 128, %s1135, %s1119
        $region60: #{tpu_custom_call.1} parent=47 // pred_fallthru
          _
        // Predicated region
        $region61: #{tpu_custom_call.1} parent=47 // pred_check
          %p1141 = pneg %p226
        $region62: #{tpu_custom_call.1} parent=47 // pred_check_branch
          %1143 = sbr.rel (%p1141) target = $region64
        $region63: #{tpu_custom_call.1} parent=47 // pred_region
          %s1145 = ssub.s32 384, 384
          %1146 = vsyncadd %s1124, %s1145
          %s1147 = smul.addr %s30, 3
          %s1148 = smul.addr %s1147, 128
          %s1149 = scalar_lea.hbm %s8, %s1148
          %s1151 = sshll.u32 %s1127, 4
          %s1152 = int_to_ptr.vmem [resolvable:$true] %s1151
          %1154 = dma.vmem_to_hbm [thread:$0]  %s1152, 384, %s1149, %s1124
        $region64: #{tpu_custom_call.1} parent=47 // pred_fallthru
          _
      $region48: #{tpu_custom_call.1} parent=5 // pred_fallthru
        _
      %p1155 = scmp.le.s32.totalorder 2, %s25
      // Predicated region
      $region65: #{tpu_custom_call.1} parent=5 // pred_check
        %p1156 = pneg %p1155
      $region66: #{tpu_custom_call.1} parent=5 // pred_check_branch
        %1158 = sbr.rel (%p1156) target = $region68
      $region67: #{tpu_custom_call.1} parent=5 // pred_region
        %s1159 = ssub.s32 %s25, 2
        // Predicated region
        $region69: #{tpu_custom_call.1} parent=67 // pred_check
          %p1160 = pneg %p206
        $region70: #{tpu_custom_call.1} parent=67 // pred_check_branch
          %1162 = sbr.rel (%p1160) target = $region72
        $region71: #{tpu_custom_call.1} parent=67 // pred_region
          %s1163 = sand.u32 %s191, 1
          %s1164 = scalar_lea.sflag [#allocation5], %s1163
          %s1165 = sand.u32 %s191, 1
          %s1166 = smul.addr %s1165, 8
          %s1167 = scalar_lea.vmem [#allocation8], %s1166
          %1168 = dma.done %s1164, 128
        $region72: #{tpu_custom_call.1} parent=67 // pred_fallthru
          _
        // Predicated region
        $region73: #{tpu_custom_call.1} parent=67 // pred_check
          %p1169 = pneg %p232
        $region74: #{tpu_custom_call.1} parent=67 // pred_check_branch
          %1171 = sbr.rel (%p1169) target = $region76
        $region75: #{tpu_custom_call.1} parent=67 // pred_region
          %s1172 = sand.u32 %s217, 1
          %s1173 = scalar_lea.sflag [#allocation10], %s1172
          %s1174 = sand.u32 %s217, 1
          %s1175 = smul.addr %s1174, 24
          %s1176 = scalar_lea.vmem [#allocation9], %s1175
          %1177 = dma.done %s1173, 384
        $region76: #{tpu_custom_call.1} parent=67 // pred_fallthru
          _
      $region68: #{tpu_custom_call.1} parent=5 // pred_fallthru
        _
    $region6: #{tpu_custom_call.1} parent=1 // loop_footer
      %s29 = sadd.s32 1, %s25
    $region7: #{tpu_custom_call.1} parent=1 // loop_footer_branch
      %24 = sbr.rel target = $region3
    $region8: #{tpu_custom_call.1} parent=1 // loop_exit
      _
    %1178 = vsyncpa [#allocation4], 1
    %s1179 = scalar_lea.sflag [#allocation4], 1
    %1180 = vsyncpa %s1179, 1
    %1181 = vsyncpa [#allocation7], 1
    %1182 = vsyncpa [#allocation5], 1
    %s1183 = scalar_lea.sflag [#allocation5], 1
    %1184 = vsyncpa %s1183, 1
    %1185 = vsyncpa [#allocation10], 1
    %s1186 = scalar_lea.sflag [#allocation10], 1
    %1187 = vsyncpa %s1186, 1

</llo_original>
